<compile_context>
chip_gen: v7x
topology: tpu7x:2x2x1
jax: 0.10.0
libtpu: 0.0.40
codegen_flags: <defaults>
</compile_context>

<pallas_src>
import functools

import jax
import jax.numpy as jnp
from jax.experimental import pallas as pl
from jax.experimental.pallas import tpu as pltpu

_MiB = 1024 * 1024


def _round_up(x, m):
    return ((x + m - 1) // m) * m


def _sublane_pack(itemsize):
    # Native sublane packing: f32 -> 8, bf16 -> 16, int8/fp8 -> 32.
    return {4: 8, 2: 16, 1: 32}.get(itemsize, 8)


def _vmem_tile_bytes(shape, itemsize):
    """VMEM tile footprint: lane dim padded to 128, sublane dim to the dtype's
    native sublane pack."""
    pack = _sublane_pack(itemsize)
    lead = 1
    for d in shape[:-2]:
        lead *= d
    return lead * _round_up(shape[-2], pack) * _round_up(shape[-1], 128) * itemsize


def _vmem_capacity_bytes():
    """Physical per-core VMEM; conservative (v7x) fallback if the query fails."""
    try:
        info = pltpu.get_tpu_info()
        cap = getattr(info, "vmem_capacity_bytes", None)
        if cap:
            return int(cap)
    except Exception:
        pass
    return 64 * _MiB


def _pick_channel_tile(c, footprint_fn, budget_bytes):
    """Largest divisor tc of c whose modeled footprint fits the budget."""
    for tc in sorted((d for d in range(1, c + 1) if c % d == 0), reverse=True):
        if footprint_fn(tc) <= budget_bytes:
            return tc
    return 1


# ----------------------------------------------------------------------------
# Kernels
# ----------------------------------------------------------------------------
def _copy_kernel(x_ref, o_ref):
    # Fast path: both refs are (1, tc, hb, wb); all real work is the
    # lane-dense pipelined DMA generated by the BlockSpecs.
    o_ref[...] = x_ref[...]


def _dma_scatter_kernel(x_hbm, o_hbm, sems, *, hb, wb, nw, n_block, nslots):
    """General path: HBM->HBM DMA scatter of the nw w-blocks of one (batch,
    h-row).  No VMEM staging, no masked vector stores; <=nslots DMAs in flight
    via a semaphore ring; every grid step is semaphore-balanced so "parallel"
    semantics (megacore sharding) stays safe."""
    i = pl.program_id(0)   # batch
    hi = pl.program_id(1)  # block row
    base = i * n_block + hi * nw
    inflight = [None] * nslots
    for wi in range(nw):  # static unroll: only scalar DMA-descriptor work
        slot = wi % nslots
        if inflight[slot] is not None:
            inflight[slot].wait()
        src = x_hbm.at[pl.ds(i, 1), :, pl.ds(hi * hb, hb), pl.ds(wi * wb, wb)]
        dst = o_hbm.at[pl.ds(base + wi, 1)]
        cp = pltpu.make_async_copy(src, dst, sems.at[slot])
        cp.start()
        inflight[slot] = cp
    for cp in inflight:
        if cp is not None:
            cp.wait()
    # TODO(synk): optionally stage full-w input rows through VMEM and scatter
    # from the VMEM slice for larger HBM read bursts when wb*itemsize is tiny.


def _split_kernel(x_ref, o_ref, *, hb, wb, nh_blk, nw):
    # Legacy fallback only: in-kernel w (and possibly h) split with vector
    # stores.  Used if the manual-DMA path fails to lower.
    for hj in range(nh_blk):
        for wi in range(nw):
            o_ref[hj * nw + wi, :, :, :] = x_ref[
                0, :, hj * hb:(hj + 1) * hb, wi * wb:(wi + 1) * wb
            ]


# ----------------------------------------------------------------------------
# pallas_call builders
# ----------------------------------------------------------------------------
def _fast_copy_call(x, hb, wb, nh, nw, n_block, tc, vmem_limit_bytes):
    b, c, _, _ = x.shape
    grid = (b, c // tc, nh, nw)
    in_spec = pl.BlockSpec((1, tc, hb, wb), lambda i, ci, hi, wi: (i, ci, hi, wi))
    out_spec = pl.BlockSpec(
        (1, tc, hb, wb),
        lambda i, ci, hi, wi: (i * n_block + hi * nw + wi, ci, 0, 0))
    return pl.pallas_call(
        _copy_kernel,
        out_shape=jax.ShapeDtypeStruct((b * n_block, c, hb, wb), x.dtype),
        grid_spec=pltpu.PrefetchScalarGridSpec(
            num_scalar_prefetch=0, grid=grid,
            in_specs=[in_spec], out_specs=out_spec),
        compiler_params=pltpu.CompilerParams(
            dimension_semantics=("parallel",) * 4,
            vmem_limit_bytes=vmem_limit_bytes),
    )(x)


def _dma_scatter_call(x, hb, wb, nh, nw, n_block):
    b, c, _, _ = x.shape
    nslots = max(1, min(nw, 8))
    kernel = functools.partial(_dma_scatter_kernel, hb=hb, wb=wb, nw=nw,
                               n_block=n_block, nslots=nslots)
    return pl.pallas_call(
        kernel,
        out_shape=jax.ShapeDtypeStruct((b * n_block, c, hb, wb), x.dtype),
        grid_spec=pltpu.PrefetchScalarGridSpec(
            num_scalar_prefetch=0, grid=(b, nh),
            in_specs=[pl.BlockSpec(memory_space=pl.ANY)],
            out_specs=pl.BlockSpec(memory_space=pl.ANY),
            scratch_shapes=[pltpu.SemaphoreType.DMA((nslots,))]),
        compiler_params=pltpu.CompilerParams(
            dimension_semantics=("parallel", "parallel")),
    )(x)


def _vector_split_call(x, hb, wb, nh, nw, n_block, budget, vmem_limit_bytes):
    # Legacy fallback (previously validated): VMEM-staged split with vector
    # stores.  Only reached if the DMA-scatter path fails to lower.
    b, c, h, w = x.shape
    itemsize = jnp.dtype(x.dtype).itemsize
    h_ok8 = (hb % 8 == 0) or (hb == h)
    nh_grid = nh if h_ok8 else 1
    nh_blk = 1 if h_ok8 else nh
    h_blk = hb if h_ok8 else h

    def footprint(tc):
        t_in = _vmem_tile_bytes((1, tc, h_blk, w), itemsize)
        t_out = _vmem_tile_bytes((nh_blk * nw, tc, hb, wb), itemsize)
        return 2 * (t_in + t_out)

    tc = _pick_channel_tile(c, footprint, budget)
    grid = (b, c // tc, nh_grid)
    kernel = functools.partial(_split_kernel, hb=hb, wb=wb, nh_blk=nh_blk, nw=nw)
    return pl.pallas_call(
        kernel,
        out_shape=jax.ShapeDtypeStruct((b * n_block, c, hb, wb), x.dtype),
        grid_spec=pltpu.PrefetchScalarGridSpec(
            num_scalar_prefetch=0, grid=grid,
            in_specs=[pl.BlockSpec((1, tc, h_blk, w),
                                   lambda i, ci, hi: (i, ci, hi, 0))],
            out_specs=pl.BlockSpec((nh_blk * nw, tc, hb, wb),
                                   lambda i, ci, hi: (i * nh_grid + hi, ci, 0, 0))),
        compiler_params=pltpu.CompilerParams(
            dimension_semantics=("parallel",) * 3,
            vmem_limit_bytes=vmem_limit_bytes),
    )(x)


# ----------------------------------------------------------------------------
# Public entry point
# ----------------------------------------------------------------------------
def block_partition(x, h_block, w_block, *,
                    vmem_budget_bytes=None,
                    vmem_limit_bytes=None,
                    scatter_mode="auto"):
    """Pallas implementation of BlockPartition.forward.

    x: (b, c, h, w)  ->  (b * n_block, c, h_block, w_block)
    """
    b, c, h, w = x.shape
    hb, wb = h_block, w_block
    assert h % hb == 0 and w % wb == 0, "h/w must be divisible by block sizes"
    nh, nw = h // hb, w // wb
    n_block = nh * nw
    itemsize = jnp.dtype(x.dtype).itemsize
    pack = _sublane_pack(itemsize)

    # Generation-aware VMEM budget / scoped limit (only the fast path stages
    # through VMEM).  v5e/v6e (128 MiB): ~48 MiB budget, ~56 MiB limit.
    # v7x (64 MiB): ~24 MiB budget, ~32 MiB limit.  Headroom left for Pallas
    # internal scratch.
    cap = _vmem_capacity_bytes()
    if vmem_budget_bytes is None:
        vmem_budget_bytes = min(48 * _MiB, max(8 * _MiB, cap // 2 - 8 * _MiB))
    if vmem_limit_bytes is None:
        vmem_limit_bytes = min(vmem_budget_bytes + 8 * _MiB, cap - 4 * _MiB)

    # Fast path gate: sublane-friendly hb for this dtype (or full h) and
    # lane-dense wb (or no w split at all).
    h_ok = (hb % pack == 0) or (hb == h)
    use_fast = h_ok and ((wb % 128 == 0) or (nw == 1))

    if use_fast:
        def footprint(tc):
            t = _vmem_tile_bytes((1, tc, hb, wb), itemsize)
            return 2 * (t + t)  # (in + out), double buffered

        tc = _pick_channel_tile(c, footprint, vmem_budget_bytes)
        # Awkward c factorization forcing tiny tiles -> the DMA-scatter path
        # (no VMEM, no per-step overhead blow-up) is the better choice.
        if tc < c and _vmem_tile_bytes((1, tc, hb, wb), itemsize) < 256 * 1024:
            use_fast = False

    if use_fast:
        return _fast_copy_call(x, hb, wb, nh, nw, n_block, tc, vmem_limit_bytes)

    if scatter_mode in ("auto", "dma"):
        try:
            return _dma_scatter_call(x, hb, wb, nh, nw, n_block)
        except Exception:
            if scatter_mode == "dma":
                raise
            # fall through to the legacy VMEM vector-split path
    return _vector_split_call(x, hb, wb, nh, nw, n_block,
                              vmem_budget_bytes, vmem_limit_bytes)


def block_partition_ref(x, h_block, w_block):
    """Pure-JAX reference mirroring the PyTorch view/permute/view."""
    b, c, h, w = x.shape
    hb, wb = h_block, w_block
    nh, nw = h // hb, w // wb
    x = x.reshape(b, c, nh, hb, nw, wb)
    x = jnp.transpose(x, (0, 2, 4, 1, 3, 5))
    return x.reshape(b * nh * nw, c, hb, wb)


if __name__ == "__main__":
    key = jax.random.PRNGKey(0)
    k1, k2, k3, k4 = jax.random.split(key, 4)

    def check(x, hb, wb, name):
        out = jax.block_until_ready(block_partition(x, hb, wb))
        ref = block_partition_ref(x, hb, wb)
        assert out.shape == ref.shape, (name, out.shape, ref.shape)
        assert jnp.array_equal(out, ref), f"{name}: mismatch vs reference"

    # 1) Module's small config (wb < 128) -> HBM->HBM DMA scatter path.
    x1 = jax.random.normal(k1, (2, 4, 16, 16), dtype=jnp.float32)
    check(x1, 8, 8, "general-f32")

    # 2) Lane-dense fast path (wb % 128 == 0): pure pipelined full-tile copies.
    x2 = jax.random.normal(k2, (1, 2, 16, 256), dtype=jnp.float32)
    check(x2, 8, 128, "fast-f32")

    # 3) bf16 with hb below its sublane pack (16) -> dtype-aware gate routes to
    #    the DMA path instead of a sublane-padded VMEM layout.
    x3 = (jax.random.normal(k3, (2, 4, 16, 16), dtype=jnp.float32)
          ).astype(jnp.bfloat16)
    check(x3, 8, 8, "general-bf16")

    # 4) hb not a multiple of 8 and != h -> DMA path with unaligned h offsets.
    x4 = jax.random.normal(k4, (2, 3, 12, 16), dtype=jnp.float32)
    check(x4, 4, 8, "general-unaligned-h")

    print("KERNEL_OK")
</pallas_src>

<mosaic_0001>
module attributes {stable_mosaic.version = 11 : i64} {
  func.func @_dma_scatter_kernel(%arg0: i32, %arg1: i32, %arg2: memref<2x4x16x16xf32, #tpu.memory_space<any>>, %arg3: memref<8x4x8x8xf32, #tpu.memory_space<any>>, %arg4: memref<2x!tpu.dma_semaphore, #tpu.memory_space<semaphore_mem>>) attributes {dimension_semantics = [#tpu.dimension_semantics<parallel>, #tpu.dimension_semantics<parallel>], iteration_bounds = array<i64: 2, 2>, scalar_prefetch = 0 : i64, scratch_operands = 1 : i64, tpu.core_type = #tpu.core_type<tc>, window_params = [{}, {}]} {
    %c4_i32 = arith.constant 4 : i32
    %0 = arith.muli %arg0, %c4_i32 : i32
    %c2_i32 = arith.constant 2 : i32
    %1 = arith.muli %arg1, %c2_i32 : i32
    %2 = arith.addi %0, %1 : i32
    %c8_i32 = arith.constant 8 : i32
    %3 = arith.muli %arg1, %c8_i32 : i32
    %c0_i32 = arith.constant 0 : i32
    %4 = arith.addi %2, %c0_i32 : i32
    %c0_i32_0 = arith.constant 0 : i32
    %c0_i32_1 = arith.constant 0 : i32
    %c0_i32_2 = arith.constant 0 : i32
    %5 = tpu.memref_slice %arg2[%arg0, %c0_i32_1, %3, %c0_i32_2] : memref<2x4x16x16xf32, #tpu.memory_space<any>> -> memref<1x4x8x8xf32, #tpu.memory_space<any>>
    %c0_i32_3 = arith.constant 0 : i32
    %c0_i32_4 = arith.constant 0 : i32
    %c0_i32_5 = arith.constant 0 : i32
    %6 = tpu.memref_slice %arg3[%4, %c0_i32_3, %c0_i32_4, %c0_i32_5] : memref<8x4x8x8xf32, #tpu.memory_space<any>> -> memref<1x4x8x8xf32, #tpu.memory_space<any>>
    %7 = tpu.memref_slice %arg4[%c0_i32_0] : memref<2x!tpu.dma_semaphore, #tpu.memory_space<semaphore_mem>> -> memref<1x!tpu.dma_semaphore, #tpu.memory_space<semaphore_mem>>
    %8 = tpu.memref_squeeze %7 : memref<1x!tpu.dma_semaphore, #tpu.memory_space<semaphore_mem>> -> memref<!tpu.dma_semaphore, #tpu.memory_space<semaphore_mem>>
    tpu.enqueue_dma source(%5 : memref<1x4x8x8xf32, #tpu.memory_space<any>>) target(%6 : memref<1x4x8x8xf32, #tpu.memory_space<any>>) target_semaphore(%8 : memref<!tpu.dma_semaphore, #tpu.memory_space<semaphore_mem>>)
    %c8_i32_6 = arith.constant 8 : i32
    %9 = arith.muli %arg1, %c8_i32_6 : i32
    %c1_i32 = arith.constant 1 : i32
    %10 = arith.addi %2, %c1_i32 : i32
    %c1_i32_7 = arith.constant 1 : i32
    %c0_i32_8 = arith.constant 0 : i32
    %c8_i32_9 = arith.constant 8 : i32
    %11 = tpu.memref_slice %arg2[%arg0, %c0_i32_8, %9, %c8_i32_9] : memref<2x4x16x16xf32, #tpu.memory_space<any>> -> memref<1x4x8x8xf32, #tpu.memory_space<any>>
    %c0_i32_10 = arith.constant 0 : i32
    %c0_i32_11 = arith.constant 0 : i32
    %c0_i32_12 = arith.constant 0 : i32
    %12 = tpu.memref_slice %arg3[%10, %c0_i32_10, %c0_i32_11, %c0_i32_12] : memref<8x4x8x8xf32, #tpu.memory_space<any>> -> memref<1x4x8x8xf32, #tpu.memory_space<any>>
    %13 = tpu.memref_slice %arg4[%c1_i32_7] : memref<2x!tpu.dma_semaphore, #tpu.memory_space<semaphore_mem>> -> memref<1x!tpu.dma_semaphore, #tpu.memory_space<semaphore_mem>>
    %14 = tpu.memref_squeeze %13 : memref<1x!tpu.dma_semaphore, #tpu.memory_space<semaphore_mem>> -> memref<!tpu.dma_semaphore, #tpu.memory_space<semaphore_mem>>
    tpu.enqueue_dma source(%11 : memref<1x4x8x8xf32, #tpu.memory_space<any>>) target(%12 : memref<1x4x8x8xf32, #tpu.memory_space<any>>) target_semaphore(%14 : memref<!tpu.dma_semaphore, #tpu.memory_space<semaphore_mem>>)
    %c0_i32_13 = arith.constant 0 : i32
    %c0_i32_14 = arith.constant 0 : i32
    %c0_i32_15 = arith.constant 0 : i32
    %15 = tpu.memref_slice %arg2[%arg0, %c0_i32_14, %3, %c0_i32_15] : memref<2x4x16x16xf32, #tpu.memory_space<any>> -> memref<1x4x8x8xf32, #tpu.memory_space<any>>
    %c0_i32_16 = arith.constant 0 : i32
    %c0_i32_17 = arith.constant 0 : i32
    %c0_i32_18 = arith.constant 0 : i32
    %16 = tpu.memref_slice %arg3[%4, %c0_i32_16, %c0_i32_17, %c0_i32_18] : memref<8x4x8x8xf32, #tpu.memory_space<any>> -> memref<1x4x8x8xf32, #tpu.memory_space<any>>
    %17 = tpu.memref_slice %arg4[%c0_i32_13] : memref<2x!tpu.dma_semaphore, #tpu.memory_space<semaphore_mem>> -> memref<1x!tpu.dma_semaphore, #tpu.memory_space<semaphore_mem>>
    %18 = tpu.memref_squeeze %17 : memref<1x!tpu.dma_semaphore, #tpu.memory_space<semaphore_mem>> -> memref<!tpu.dma_semaphore, #tpu.memory_space<semaphore_mem>>
    tpu.wait_dma2 semaphore(%18 : memref<!tpu.dma_semaphore, #tpu.memory_space<semaphore_mem>>) src(%15 : memref<1x4x8x8xf32, #tpu.memory_space<any>>) dst(%16 : memref<1x4x8x8xf32, #tpu.memory_space<any>>)
    %c1_i32_19 = arith.constant 1 : i32
    %c0_i32_20 = arith.constant 0 : i32
    %c8_i32_21 = arith.constant 8 : i32
    %19 = tpu.memref_slice %arg2[%arg0, %c0_i32_20, %9, %c8_i32_21] : memref<2x4x16x16xf32, #tpu.memory_space<any>> -> memref<1x4x8x8xf32, #tpu.memory_space<any>>
    %c0_i32_22 = arith.constant 0 : i32
    %c0_i32_23 = arith.constant 0 : i32
    %c0_i32_24 = arith.constant 0 : i32
    %20 = tpu.memref_slice %arg3[%10, %c0_i32_22, %c0_i32_23, %c0_i32_24] : memref<8x4x8x8xf32, #tpu.memory_space<any>> -> memref<1x4x8x8xf32, #tpu.memory_space<any>>
    %21 = tpu.memref_slice %arg4[%c1_i32_19] : memref<2x!tpu.dma_semaphore, #tpu.memory_space<semaphore_mem>> -> memref<1x!tpu.dma_semaphore, #tpu.memory_space<semaphore_mem>>
    %22 = tpu.memref_squeeze %21 : memref<1x!tpu.dma_semaphore, #tpu.memory_space<semaphore_mem>> -> memref<!tpu.dma_semaphore, #tpu.memory_space<semaphore_mem>>
    tpu.wait_dma2 semaphore(%22 : memref<!tpu.dma_semaphore, #tpu.memory_space<semaphore_mem>>) src(%19 : memref<1x4x8x8xf32, #tpu.memory_space<any>>) dst(%20 : memref<1x4x8x8xf32, #tpu.memory_space<any>>)
    return
  }
}

module attributes {stable_mosaic.version = 11 : i64} {
  func.func @_split_kernel(%arg0: i32, %arg1: i32, %arg2: i32, %arg3: memref<1x4x8x16xf32, #tpu.memory_space<vmem>>, %arg4: memref<2x4x8x8xf32, #tpu.memory_space<vmem>>) attributes {dimension_semantics = [#tpu.dimension_semantics<parallel>, #tpu.dimension_semantics<parallel>, #tpu.dimension_semantics<parallel>], iteration_bounds = array<i64: 2, 1, 2>, scalar_prefetch = 0 : i64, scratch_operands = 0 : i64, tpu.core_type = #tpu.core_type<tc>, window_params = [{transform_indices = @transform_0, window_bounds = array<i64: 1, 4, 8, 16>}, {transform_indices = @transform_1, window_bounds = array<i64: 2, 4, 8, 8>}]} {
    %c0 = arith.constant 0 : index
    %c0_0 = arith.constant 0 : index
    %c0_1 = arith.constant 0 : index
    %c0_2 = arith.constant 0 : index
    %0 = vector.load %arg3[%c0, %c0_0, %c0_1, %c0_2] : memref<1x4x8x16xf32, #tpu.memory_space<vmem>>, vector<1x4x8x8xf32>
    %1 = vector.shape_cast %0 : vector<1x4x8x8xf32> to vector<4x8x8xf32>
    %c0_3 = arith.constant 0 : index
    %c0_4 = arith.constant 0 : index
    %c0_5 = arith.constant 0 : index
    %c0_6 = arith.constant 0 : index
    %2 = vector.load %arg4[%c0_3, %c0_4, %c0_5, %c0_6] : memref<2x4x8x8xf32, #tpu.memory_space<vmem>>, vector<1x4x8x8xf32>
    %3 = vector.shape_cast %2 : vector<1x4x8x8xf32> to vector<4x8x8xf32>
    %4 = vector.shape_cast %1 : vector<4x8x8xf32> to vector<1x4x8x8xf32>
    tpu.vector_store %arg4[%c0_3, %c0_4, %c0_5, %c0_6], %4 {strides = array<i32>} : memref<2x4x8x8xf32, #tpu.memory_space<vmem>>, vector<1x4x8x8xf32>,
    %c0_7 = arith.constant 0 : index
    %c0_8 = arith.constant 0 : index
    %c0_9 = arith.constant 0 : index
    %c8 = arith.constant 8 : index
    %5 = vector.load %arg3[%c0_7, %c0_8, %c0_9, %c8] : memref<1x4x8x16xf32, #tpu.memory_space<vmem>>, vector<1x4x8x8xf32>
    %6 = vector.shape_cast %5 : vector<1x4x8x8xf32> to vector<4x8x8xf32>
    %c1 = arith.constant 1 : index
    %c0_10 = arith.constant 0 : index
    %c0_11 = arith.constant 0 : index
    %c0_12 = arith.constant 0 : index
    %7 = vector.load %arg4[%c1, %c0_10, %c0_11, %c0_12] : memref<2x4x8x8xf32, #tpu.memory_space<vmem>>, vector<1x4x8x8xf32>
    %8 = vector.shape_cast %7 : vector<1x4x8x8xf32> to vector<4x8x8xf32>
    %9 = vector.shape_cast %6 : vector<4x8x8xf32> to vector<1x4x8x8xf32>
    tpu.vector_store %arg4[%c1, %c0_10, %c0_11, %c0_12], %9 {strides = array<i32>} : memref<2x4x8x8xf32, #tpu.memory_space<vmem>>, vector<1x4x8x8xf32>,
    return
  }
  func.func @transform_0(%arg0: i32, %arg1: i32, %arg2: i32) -> (i32, i32, i32, i32) {
    %c0_i32 = arith.constant 0 : i32
    %c0_i32_0 = arith.constant 0 : i32
    return %arg0, %arg1, %arg2, %c0_i32 : i32, i32, i32, i32
  }
  func.func @transform_1(%arg0: i32, %arg1: i32, %arg2: i32) -> (i32, i32, i32, i32) {
    %c2_i32 = arith.constant 2 : i32
    %0 = arith.muli %arg0, %c2_i32 : i32
    %1 = arith.addi %0, %arg2 : i32
    %c0_i32 = arith.constant 0 : i32
    %c0_i32_0 = arith.constant 0 : i32
    %c0_i32_1 = arith.constant 0 : i32
    return %1, %arg1, %c0_i32, %c0_i32_0 : i32, i32, i32, i32
  }
}

</mosaic_0001>

<llo_original>
// kernel: tpu_custom_call.1
$region0: #{tpu_custom_call.1}
  #allocation0 [shape = 'u32[]', space=smem, size = 0x4, offset = 0x4, fixed_abs, tag = 'smem constant byte address 0x4 - core index']
  #allocation1 [shape = 'u32[144,128]{1,0:T(1,128)}', space=vmem, size = 0x12000, scoped, tag = 'internal scratch']
  %s0 = inlined_call_operand.hbm [shape: f32[2,4,16,16], index: 0, kind: input, shape index: {}]
  %s1 = inlined_call_operand.hbm [shape: f32[8,4,8,8], index: 1, kind: output, shape index: {}]
  %s2 = sld [smem:[#allocation0]]
  $region41: #{tpu_custom_call.1} parent=0
    _
  %s4 = ssub.s32 1, %s2
  %s5 = scalar_select 0, %s4, %s2
  $region1: #{tpu_custom_call.1} parent=0
    #allocation2 [shape = 'u8[32768]{0}', space=vmem, size = 0x8000, scoped, tag = 'input window, operand 0']
    #allocation3 [shape = 's32[2]{0}', space=sflag, size = 0x8, scoped, tag = 'scoped memory for tpu_custom_call.1']
    #allocation4 [shape = 's32[2]{0}', space=sflag, size = 0x8, scoped, tag = 'scoped memory for tpu_custom_call.1']
    #allocation5 [shape = 'u8[65536]{0}', space=vmem, size = 0x10000, scoped, tag = 'output window, operand 0']
    %6 = vsyncpa [#allocation3], 0
    %s7 = scalar_lea.sflag [#allocation3], 1
    %8 = vsyncpa %s7, 0
    %9 = vsyncpa [#allocation4], 0
    %s10 = scalar_lea.sflag [#allocation4], 1
    %11 = vsyncpa %s10, 0
    loop: start=0, step=1, limit=6
    $region2: #{tpu_custom_call.1} parent=1 // loop_pre_header
      _
    $region3: #{tpu_custom_call.1} parent=1 // loop_header
      %s13 = sphi 0, %s17
      %p14 = scmp.ge.s32.totalorder %s13, 6
      %s20 = sphi 0, %s39
      %s21 = sphi 0, %s35
      %s22 = sphi 0, %s31
      %s23 = sphi 0, %s20
      %s24 = sphi 0, %s21
      %s25 = sphi 0, %s22
      %s26 = sphi 0, %s23
      %s27 = sphi 0, %s24
      %s28 = sphi 0, %s25
      %s46 = sphi 0, %s48
      %s49 = sphi 0, %s46
      %s50 = sphi 0, %s49
      %s66 = sphi 0, %s50
      %s78 = sphi 0, %s80
      %s81 = sphi 0, %s78
      %s82 = sphi 0, %s81
      %s98 = sphi 0, %s82
    $region4: #{tpu_custom_call.1} parent=1 // loop_header_branch
      %16 = sbr.rel (%p14) target = $region8
    $region5: #{tpu_custom_call.1} parent=1 // loop_body
      %s18 = ssub.s32 %s13, 1
      %s19 = ssub.s32 %s13, 2
      %s29 = sadd.s32 1, %s22
      %p30 = scmp.ge.s32.totalorder %s29, 2
      %s31 = scalar_select %p30, 0, %s29
      %s32 = sadd.s32 1, %s21
      %s33 = scalar_select %p30, %s32, %s21
      %p34 = scmp.ge.s32.totalorder %s33, 1
      %s35 = scalar_select %p34, 0, %s33
      %s36 = sadd.s32 1, %s20
      %s37 = scalar_select %p34, %s36, %s20
      %p38 = scmp.ge.s32.totalorder %s37, 2
      %s39 = scalar_select %p38, 0, %s37
      %s40 = ssub.s32 %s20, %s39
      %s41 = ssub.s32 %s21, %s35
      %s42 = sor.u32 %s40, %s41
      %s43 = ssub.s32 %s22, %s31
      %s44 = sor.u32 %s42, %s43
      %p45 = scmp.eq.s32.totalorder %s44, 0
      %s47 = sadd.s32 %s46, 1
      %s48 = scalar_select %p45, %s46, %s47
      %p51 = pneg %p45
      %p52 = scmp.eq.s32.totalorder %s13, 3
      %p53 = por %p51, %p52
      %p54 = scmp.ne.s32.totalorder %s46, %s49
      %p55 = scmp.eq.s32.totalorder %s13, 0
      %p56 = por %p54, %p55
      %p57 = scmp.ne.s32.totalorder %s46, %s49
      %p58 = scmp.eq.s32.totalorder %s18, 3
      %p59 = por %p57, %p58
      %p60 = scmp.ne.s32.totalorder %s49, %s50
      %p61 = scmp.eq.s32.totalorder %s18, 0
      %p62 = por %p60, %p61
      %p63 = scmp.ne.s32.totalorder %s49, %s50
      %p64 = scmp.eq.s32.totalorder %s19, 3
      %p65 = por %p63, %p64
      %p67 = scmp.ne.s32.totalorder %s50, %s66
      %p68 = scmp.eq.s32.totalorder %s19, 0
      %p69 = por %p67, %p68
      %s70 = smul.u32 %s20, 2
      %s71 = sadd.s32 %s70, %s22
      %s72 = smul.u32 %s39, 2
      %s73 = sadd.s32 %s72, %s31
      %s74 = ssub.s32 %s71, %s73
      %s75 = ssub.s32 %s21, %s35
      %s76 = sor.u32 %s74, %s75
      %p77 = scmp.eq.s32.totalorder %s76, 0
      %s79 = sadd.s32 %s78, 1
      %s80 = scalar_select %p77, %s78, %s79
      %p83 = pneg %p77
      %p84 = scmp.eq.s32.totalorder %s13, 3
      %p85 = por %p83, %p84
      %p86 = scmp.ne.s32.totalorder %s78, %s81
      %p87 = scmp.eq.s32.totalorder %s13, 0
      %p88 = por %p86, %p87
      %p89 = scmp.ne.s32.totalorder %s78, %s81
      %p90 = scmp.eq.s32.totalorder %s18, 3
      %p91 = por %p89, %p90
      %p92 = scmp.ne.s32.totalorder %s81, %s82
      %p93 = scmp.eq.s32.totalorder %s18, 0
      %p94 = por %p92, %p93
      %p95 = scmp.ne.s32.totalorder %s81, %s82
      %p96 = scmp.eq.s32.totalorder %s19, 3
      %p97 = por %p95, %p96
      %p99 = scmp.ne.s32.totalorder %s82, %s98
      %p100 = scmp.eq.s32.totalorder %s19, 0
      %p101 = por %p99, %p100
      %p102 = scmp.le.s32.totalorder 1, %s13
      %p103 = scmp.lt.s32.totalorder %s13, 5
      %p104 = pnand %p102, %p103
      %p105 = pneg %p104
      // Predicated region
      $region9: #{tpu_custom_call.1} parent=5 // pred_check
        _
      $region10: #{tpu_custom_call.1} parent=5 // pred_check_branch
        %107 = sbr.rel (%p104) target = $region12
      $region11: #{tpu_custom_call.1} parent=5 // pred_region
        %s108 = ssub.s32 %s13, 1
      $region12: #{tpu_custom_call.1} parent=5 // pred_fallthru
        _
      %p109 = scmp.lt.s32.totalorder %s13, 4
      // Predicated region
      $region13: #{tpu_custom_call.1} parent=5 // pred_check
        %p110 = pneg %p109
      $region14: #{tpu_custom_call.1} parent=5 // pred_check_branch
        %112 = sbr.rel (%p110) target = $region16
      $region15: #{tpu_custom_call.1} parent=5 // pred_region
        // Predicated region
        $region17: #{tpu_custom_call.1} parent=15 // pred_check
          %p113 = pneg %p56
        $region18: #{tpu_custom_call.1} parent=15 // pred_check_branch
          %115 = sbr.rel (%p113) target = $region20
        $region19: #{tpu_custom_call.1} parent=15 // pred_region
          %s116 = sand.u32 %s46, 1
          %s117 = scalar_lea.sflag [#allocation3], %s116
          %s118 = sand.u32 %s46, 1
          %s119 = smul.addr %s118, 32
          %s120 = scalar_lea.vmem [#allocation2], %s119
          %s121 = smul.u32 4, %s21
          %s123 = ssub.s32 512, 512
          %124 = vsyncadd %s117, %s123
          %s125 = smul.addr %s121, 2
          %s126 = sadd.s32 %s22, %s125
          %s127 = smul.addr %s20, 8
          %s128 = sadd.s32 %s126, %s127
          %s129 = smul.addr %s128, 128
          %s130 = scalar_lea.hbm %s0, %s129
          %s131 = sshll.u32 %s120, 4
          %s132 = int_to_ptr.vmem [resolvable:$true] %s131
          %137 = dma.hbm_to_vmem [thread:$0]  %s130, 512, %s132, %s117, 256, 128, 8
        $region20: #{tpu_custom_call.1} parent=15 // pred_fallthru
          _
      $region16: #{tpu_custom_call.1} parent=5 // pred_fallthru
        _
      %p138 = scmp.le.s32.totalorder 1, %s13
      %p139 = scmp.lt.s32.totalorder %s13, 5
      %p140 = pnand %p138, %p139
      %p141 = pneg %p140
      // Predicated region
      $region21: #{tpu_custom_call.1} parent=5 // pred_check
        _
      $region22: #{tpu_custom_call.1} parent=5 // pred_check_branch
        %143 = sbr.rel (%p140) target = $region24
      $region23: #{tpu_custom_call.1} parent=5 // pred_region
        %s144 = ssub.s32 %s13, 1
        %s145 = sand.u32 %s49, 1
        %s146 = scalar_lea.sflag [#allocation3], %s145
        %s147 = sand.u32 %s49, 1
        %s148 = smul.addr %s147, 32
        %s149 = scalar_lea.vmem [#allocation2], %s148
        // Predicated region
        $region25: #{tpu_custom_call.1} parent=23 // pred_check
          %p150 = pneg %p62
        $region26: #{tpu_custom_call.1} parent=23 // pred_check_branch
          %152 = sbr.rel (%p150) target = $region28
        $region27: #{tpu_custom_call.1} parent=23 // pred_region
          %153 = dma.done %s146, 512
        $region28: #{tpu_custom_call.1} parent=23 // pred_fallthru
          _
        %s154 = sand.u32 %s49, 1
        %s155 = scalar_lea.sflag [#allocation3], %s154
        %s156 = sand.u32 %s49, 1
        %s157 = smul.addr %s156, 32
        %s158 = scalar_lea.vmem [#allocation2], %s157
        %p159 = pneg %p62
        %p160 = pneg %p59
        %p161 = pneg %p94
        %p162 = pneg %p91
        %s163 = sand.u32 %s81, 1
        %s164 = scalar_lea.sflag [#allocation4], %s163
        %s165 = sand.u32 %s81, 1
        %s166 = smul.addr %s165, 64
        %s167 = scalar_lea.vmem [#allocation5], %s166
        %s168 = smul.u32 4, %s24
        %s169 = smul.u32 %s23, 2
        %s170 = sadd.s32 %s169, %s25
        %s171 = smul.u32 2, %s170
        %s172 = smul.u32 4, %s24
        %v173 = vld [vmem:[%s149] sm:$0xff]
        %v174 = vld [vmem:[%s149 + $0x8] sm:$0xff]
        %v175 = vld [vmem:[%s149 + $0x10] sm:$0xff]
        %v176 = vld [vmem:[%s149 + $0x18] sm:$0xff]
        %vm177 = vcmask 64512
        %178 = vst.msk [vmem:[%s167] sm:$0xff] %vm177, %v173
        %179 = vst.msk [vmem:[%s167 + $0x8] sm:$0xff] %vm177, %v174
        %180 = vst.msk [vmem:[%s167 + $0x10] sm:$0xff] %vm177, %v175
        %181 = vst.msk [vmem:[%s167 + $0x18] sm:$0xff] %vm177, %v176
        %v182 = vld [vmem:[%s149] sm:$0xff]
        %v183 = vld [vmem:[%s149 + $0x8] sm:$0xff]
        %v184 = vld [vmem:[%s149 + $0x10] sm:$0xff]
        %v185 = vld [vmem:[%s149 + $0x18] sm:$0xff]
        %190 = vrot.lane.b32.xlu0 %v182, 120
        %v191 = vpop.permute.xlu0 %190
        %192 = vrot.lane.b32.xlu0 %v183, 120
        %v193 = vpop.permute.xlu0 %192
        %194 = vrot.lane.b32.xlu0 %v184, 120
        %v195 = vpop.permute.xlu0 %194
        %196 = vrot.lane.b32.xlu0 %v185, 120
        %v197 = vpop.permute.xlu0 %196
        %s202 = scalar_lea.vmem %s167, 32 [#allocation5]
        %203 = vst.msk [vmem:[%s202] sm:$0xff] %vm177, %v191
        %204 = vst.msk [vmem:[%s202 + $0x8] sm:$0xff] %vm177, %v193
        %205 = vst.msk [vmem:[%s202 + $0x10] sm:$0xff] %vm177, %v195
        %206 = vst.msk [vmem:[%s202 + $0x18] sm:$0xff] %vm177, %v197
        %s207 = sand.u32 %s81, 1
        %s208 = scalar_lea.sflag [#allocation4], %s207
        %s209 = sand.u32 %s81, 1
        %s210 = smul.addr %s209, 64
        %s211 = scalar_lea.vmem [#allocation5], %s210
        // Predicated region
        $region29: #{tpu_custom_call.1} parent=23 // pred_check
          %p212 = pneg %p91
        $region30: #{tpu_custom_call.1} parent=23 // pred_check_branch
          %214 = sbr.rel (%p212) target = $region32
        $region31: #{tpu_custom_call.1} parent=23 // pred_region
          %s215 = smul.u32 %s23, 2
          %s216 = sadd.s32 %s215, %s25
          %s217 = smul.u32 2, %s216
          %s218 = smul.u32 4, %s24
          %s220 = ssub.s32 1024, 1024
          %221 = vsyncadd %s208, %s220
          %s222 = smul.addr %s217, 4
          %s223 = sadd.s32 %s218, %s222
          %s224 = smul.addr %s223, 128
          %s225 = scalar_lea.hbm %s1, %s224
          %s226 = sshll.u32 %s211, 4
          %s227 = int_to_ptr.vmem [resolvable:$true] %s226
          %232 = dma.vmem_to_hbm [thread:$0]  %s227, 1024, %s225, %s208, 128, 128, 8
        $region32: #{tpu_custom_call.1} parent=23 // pred_fallthru
          _
      $region24: #{tpu_custom_call.1} parent=5 // pred_fallthru
        _
      %p233 = scmp.le.s32.totalorder 2, %s13
      // Predicated region
      $region33: #{tpu_custom_call.1} parent=5 // pred_check
        %p234 = pneg %p233
      $region34: #{tpu_custom_call.1} parent=5 // pred_check_branch
        %236 = sbr.rel (%p234) target = $region36
      $region35: #{tpu_custom_call.1} parent=5 // pred_region
        %s237 = ssub.s32 %s13, 2
        // Predicated region
        $region37: #{tpu_custom_call.1} parent=35 // pred_check
          %p238 = pneg %p97
        $region38: #{tpu_custom_call.1} parent=35 // pred_check_branch
          %240 = sbr.rel (%p238) target = $region40
        $region39: #{tpu_custom_call.1} parent=35 // pred_region
          %s241 = sand.u32 %s82, 1
          %s242 = scalar_lea.sflag [#allocation4], %s241
          %s243 = sand.u32 %s82, 1
          %s244 = smul.addr %s243, 64
          %s245 = scalar_lea.vmem [#allocation5], %s244
          %246 = dma.done %s242, 1024
        $region40: #{tpu_custom_call.1} parent=35 // pred_fallthru
          _
      $region36: #{tpu_custom_call.1} parent=5 // pred_fallthru
        _
    $region6: #{tpu_custom_call.1} parent=1 // loop_footer
      %s17 = sadd.s32 1, %s13
    $region7: #{tpu_custom_call.1} parent=1 // loop_footer_branch
      %12 = sbr.rel target = $region3
    $region8: #{tpu_custom_call.1} parent=1 // loop_exit
      _
    %247 = vsyncpa [#allocation3], 1
    %s248 = scalar_lea.sflag [#allocation3], 1
    %249 = vsyncpa %s248, 1
    %250 = vsyncpa [#allocation4], 1
    %s251 = scalar_lea.sflag [#allocation4], 1
    %252 = vsyncpa %s251, 1

</llo_original>
